<compile_context>
chip_gen: v7x
topology: tpu7x:2x2x1
jax: 0.10.0
libtpu: 0.0.40
codegen_flags: <defaults>
</compile_context>

<pallas_src>
from functools import partial

import jax
import jax.numpy as jnp
from jax import lax
from jax.experimental import pallas as pl
from jax.experimental.pallas import tpu as pltpu

NUM_BANDS = 7        # use_old_bands=False => 7 bands
LANE = 128           # lane-dense padded logits width (matches v5e 4x128^2 MXU; never pad to 256)
NEG_BIG = -1e30      # padded-column bias (finite, so no inf-inf NaNs)


def band_predictor_kernel(label_ref, x_ref, wt_ref, meta_ref,
                          loss_ref, acc_ref, loss_sum, correct_sum,
                          *, true_b, tb, tiles_per_core):
    """Grid: (num_cores "parallel", tiles_per_core "arbitrary").

    label_ref:   (1,)          i32, SMEM (scalar prefetch)
    x_ref:       (TB, D)       f32, VMEM (pipelined batch tile; cast to bf16 in-kernel)
    wt_ref:      (D, 128)      bf16, VMEM (resident, Linear weight transposed + zero-padded)
    meta_ref:    (8, 128)      f32,  VMEM (resident: row0 bias(-1e30 pad), row1 one-hot(label),
                                           row2 column index (pad=128))
    loss_ref:    (8, 128)      f32 output block (per-core partial sum of CE loss, broadcast)
    acc_ref:     (8, 128)      f32 output block (per-core partial count of correct preds)
    loss_sum, correct_sum: (1, 1) f32 VMEM scratch accumulators
    """
    c = pl.program_id(0)          # core / batch-range axis ("parallel")
    i = pl.program_id(1)          # batch-tile reduction axis ("arbitrary")

    @pl.when(i == 0)
    def _init():
        loss_sum[...] = jnp.zeros_like(loss_sum)
        correct_sum[...] = jnp.zeros_like(correct_sum)

    # Cast the f32 tile to bf16 in VMEM (cheap VPU work hidden under the DMA), then MXU.
    xb = x_ref[...].astype(jnp.bfloat16)
    z = jnp.dot(xb, wt_ref[...], preferred_element_type=jnp.float32)     # (TB, 128) f32

    meta = meta_ref[...]
    bias = meta[0:1, :]          # padded cols = -1e30 -> never win max / logsumexp / argmax
    onehot = meta[1:2, :]        # one_hot(label), f32
    colidx = meta[2:3, :]        # 0..num_bands-1, padded cols = 128
    z = z + bias

    # Rows past the true batch (ragged tail / clamped overflow tiles) are masked out.
    # jnp.where *selects*, so NaN/Inf arising from undefined HBM padding rows never leaks in.
    tile = c * tiles_per_core + i
    row = lax.broadcasted_iota(jnp.int32, (tb, 1), 0) + tile * tb
    valid = row < true_b

    # Numerically stable cross-entropy with constant target `label`.
    m = jnp.max(z, axis=1, keepdims=True)                                 # (TB, 1)
    lse = m + jnp.log(jnp.sum(jnp.exp(z - m), axis=1, keepdims=True))     # (TB, 1)
    z_label = jnp.sum(z * onehot, axis=1, keepdims=True)                  # (TB, 1)
    loss_rows = jnp.where(valid, lse - z_label, 0.0)

    # argmax over softmax == argmax over logits; min-index tie-break like torch / jnp.argmax.
    label_f = label_ref[0].astype(jnp.float32)
    preds = jnp.min(jnp.where(z == m, colidx, jnp.float32(LANE)), axis=1, keepdims=True)
    correct_rows = jnp.where(valid & (preds == label_f), 1.0, 0.0)

    loss_sum[...] += jnp.sum(loss_rows, axis=0, keepdims=True)
    correct_sum[...] += jnp.sum(correct_rows, axis=0, keepdims=True)

    @pl.when(i == pl.num_programs(1) - 1)
    def _finalize():
        # Lane-dense (8,128) per-core partial-sum blocks; combined (and /B) in the wrapper.
        loss_ref[...] = jnp.broadcast_to(loss_sum[...], loss_ref.shape)
        acc_ref[...] = jnp.broadcast_to(correct_sum[...], acc_ref.shape)


def _vmem_capacity_bytes():
    try:
        return int(pltpu.get_tpu_info().vmem_capacity_bytes)
    except Exception:
        return 128 * 1024 * 1024        # v5e/v6e default if the query is unavailable


def _vmem_limit_bytes():
    # ~96 MiB scoped limit on v5e/v6e (128 MiB VMEM), ~48 MiB on v7x (64 MiB VMEM).
    return min(_vmem_capacity_bytes() * 3 // 4, 96 * 1024 * 1024)


def _choose_tb(B, D, vmem_limit, wt_buffers):
    """Byte-budgeted batch tile for the double-buffered f32 x stream."""
    resident = D * LANE * 2 * wt_buffers + 8 * LANE * 4 * 2 + (1 << 20)   # W^T + meta + slack
    avail = max(vmem_limit - resident, 2 * 1024 * 1024)
    per_buf = min(avail // 2, vmem_limit // 4)      # ~24 MiB/buffer v5e/v6e, ~12 MiB v7x
    tb = per_buf // (D * 4)                         # f32 rows per buffer
    if tb >= B:
        return B                                    # single tile == full array dims
    return max(8, (tb // 8) * 8)


def band_predictor_forward(x, weight, bias, label, *, tb=None):
    """x: (B, ...) f32; weight: (NUM_BANDS, D); bias: (NUM_BANDS,); label: int (python or jnp)."""
    B = x.shape[0]
    x2 = x.reshape(B, -1)                # stays f32: single HBM read, bf16 cast happens in-kernel
    D = x2.shape[1]
    nb = weight.shape[0]

    # Resident operands (tiny, one-time wrapper cost).
    wt = jnp.zeros((D, LANE), jnp.bfloat16).at[:, :nb].set(
        jnp.transpose(weight).astype(jnp.bfloat16))
    label_arr = jnp.asarray(label, dtype=jnp.int32).reshape((1,))
    col = jnp.arange(LANE, dtype=jnp.int32)
    meta = jnp.zeros((8, LANE), jnp.float32)
    meta = meta.at[0, :].set(
        jnp.full((LANE,), NEG_BIG, jnp.float32).at[:nb].set(bias.astype(jnp.float32)))
    meta = meta.at[1, :].set((col == label_arr[0]).astype(jnp.float32))
    meta = meta.at[2, :].set(jnp.where(col < nb, col, LANE).astype(jnp.float32))

    vmem_limit = _vmem_limit_bytes()

    def run(single_buffer_resident):
        wt_buffers = 1 if single_buffer_resident else 2
        if tb is None:
            tb_ = _choose_tb(B, D, vmem_limit, wt_buffers)
        else:
            tb_ = max(1, min(tb, B))
            if tb_ < B:
                tb_ = max(8, (tb_ // 8) * 8)

        num_tiles = pl.cdiv(B, tb_)
        # Leading "parallel" axis -> both TensorCores on v7x; serial (and harmless) on v5e/v6e.
        num_cores = 2 if num_tiles >= 2 else 1
        tiles_per_core = pl.cdiv(num_tiles, num_cores)

        # Overflow tiles (odd tile counts) clamp to the last valid block; their rows are
        # masked out in-kernel via the `valid` row test.
        def x_map(c, i, lbl):
            return (jnp.minimum(c * tiles_per_core + i, num_tiles - 1), 0)

        resident_kwargs = {}
        if single_buffer_resident:
            resident_kwargs = dict(pipeline_mode=pl.Buffered(1))   # constant index map

        kernel = partial(band_predictor_kernel, true_b=B, tb=tb_,
                         tiles_per_core=tiles_per_core)

        cost = pl.CostEstimate(
            flops=2 * B * D * LANE,
            transcendentals=B * (LANE + 1),
            bytes_accessed=B * D * 4 + D * LANE * 2 + 8 * LANE * 4
                           + 2 * num_cores * 8 * LANE * 4,
        )

        loss_p, corr_p = pl.pallas_call(
            kernel,
            out_shape=(
                jax.ShapeDtypeStruct((num_cores * 8, LANE), jnp.float32),
                jax.ShapeDtypeStruct((num_cores * 8, LANE), jnp.float32),
            ),
            grid_spec=pltpu.PrefetchScalarGridSpec(
                num_scalar_prefetch=1,                                  # label -> SMEM
                grid=(num_cores, tiles_per_core),
                in_specs=[
                    pl.BlockSpec((tb_, D), x_map),                      # x tiles (pipelined)
                    pl.BlockSpec((D, LANE), lambda c, i, lbl: (0, 0),   # W^T (resident)
                                 **resident_kwargs),
                    pl.BlockSpec((8, LANE), lambda c, i, lbl: (0, 0),   # bias/one-hot/colidx
                                 **resident_kwargs),
                ],
                out_specs=(
                    pl.BlockSpec((8, LANE), lambda c, i, lbl: (c, 0)),
                    pl.BlockSpec((8, LANE), lambda c, i, lbl: (c, 0)),
                ),
                scratch_shapes=[
                    pltpu.VMEM((1, 1), jnp.float32),   # running loss sum
                    pltpu.VMEM((1, 1), jnp.float32),   # running correct count
                ],
            ),
            compiler_params=pltpu.CompilerParams(
                dimension_semantics=("parallel", "arbitrary"),
                vmem_limit_bytes=vmem_limit,
            ),
            cost_estimate=cost,
        )(label_arr, x2, wt, meta)
        return loss_p, corr_p, num_cores

    try:
        loss_p, corr_p, num_cores = run(True)
    except Exception:
        # Installed jax rejected per-spec single buffering -> default double buffering.
        loss_p, corr_p, num_cores = run(False)

    inv_b = jnp.float32(1.0 / B)
    loss = jnp.sum(loss_p.reshape(num_cores, 8, LANE)[:, 0, 0]) * inv_b
    acc = jnp.sum(corr_p.reshape(num_cores, 8, LANE)[:, 0, 0]) * inv_b
    # TODO(synk): v7x-only fp8 x / W^T variant (scale folded into W^T) would halve x HBM bytes again.
    # TODO(synk): very large input_dim (D*256 B W^T ~ VMEM limit) would additionally need D-tiling.
    return {"band_ce_loss": loss, "band_accuracy": acc}


def _reference_forward(x, weight, bias, label):
    """Pure-JAX reference of the PyTorch forward, with the same bf16 rounding of x and W."""
    B = x.shape[0]
    x2 = x.reshape(B, -1).astype(jnp.bfloat16).astype(jnp.float32)
    w = weight.astype(jnp.bfloat16).astype(jnp.float32)
    z = x2 @ w.T + bias.astype(jnp.float32)
    lse = jax.scipy.special.logsumexp(z, axis=1)
    loss = jnp.mean(lse - z[:, label])
    preds = jnp.argmax(jax.nn.softmax(z, axis=1), axis=1)
    acc = jnp.mean((preds == label).astype(jnp.float32))
    return loss, acc


if __name__ == "__main__":
    key = jax.random.PRNGKey(0)
    B, C, T = 2, 4, 16                  # encoded brain signal: (B, C, T)
    D = C * T                           # input_dim after flatten(start_dim=1)
    kx, kw, kb = jax.random.split(key, 3)

    x = jax.random.normal(kx, (B, C, T), dtype=jnp.float32)
    weight = jax.random.normal(kw, (NUM_BANDS, D), dtype=jnp.float32) / jnp.sqrt(D)
    bias = 0.01 * jax.random.normal(kb, (NUM_BANDS,), dtype=jnp.float32)
    label = 3

    out = band_predictor_forward(x, weight, bias, label)
    jax.block_until_ready(out)
    ref_loss, ref_acc = _reference_forward(x, weight, bias, label)
    assert jnp.allclose(out["band_ce_loss"], ref_loss, atol=2e-3, rtol=2e-3), \
        (out["band_ce_loss"], ref_loss)
    assert jnp.allclose(out["band_accuracy"], ref_acc, atol=1e-6), \
        (out["band_accuracy"], ref_acc)

    # Multi-tile + ragged tail + dual-core split: B=20, TB=8 -> core0 tiles {0,1},
    # core1 tiles {2, clamp(3)->2 (fully masked)}; 4 tail rows masked.
    B2 = 20
    xb2 = jax.random.normal(jax.random.PRNGKey(1), (B2, C, T), dtype=jnp.float32)
    out2 = band_predictor_forward(xb2, weight, bias, label, tb=8)
    jax.block_until_ready(out2)
    ref_loss2, ref_acc2 = _reference_forward(xb2, weight, bias, label)
    assert jnp.allclose(out2["band_ce_loss"], ref_loss2, atol=2e-3, rtol=2e-3), \
        (out2["band_ce_loss"], ref_loss2)
    assert jnp.allclose(out2["band_accuracy"], ref_acc2, atol=1e-6), \
        (out2["band_accuracy"], ref_acc2)

    print("KERNEL_OK")
</pallas_src>

<mosaic_0001>
module attributes {stable_mosaic.version = 11 : i64} {
  func.func @band_predictor_kernel(%arg0: i32, %arg1: i32, %arg2: memref<1xi32, #tpu.memory_space<smem>>, %arg3: memref<2x64xf32, #tpu.memory_space<vmem>>, %arg4: memref<64x128xbf16, #tpu.memory_space<vmem>>, %arg5: memref<8x128xf32, #tpu.memory_space<vmem>>, %arg6: memref<8x128xf32, #tpu.memory_space<vmem>>, %arg7: memref<8x128xf32, #tpu.memory_space<vmem>>, %arg8: memref<1x1xf32, #tpu.memory_space<vmem>>, %arg9: memref<1x1xf32, #tpu.memory_space<vmem>>) attributes {dimension_semantics = [#tpu.dimension_semantics<parallel>, #tpu.dimension_semantics<arbitrary>], iteration_bounds = array<i64: 1, 1>, scalar_prefetch = 1 : i64, scratch_operands = 2 : i64, tpu.core_type = #tpu.core_type<tc>, window_params = [{transform_indices = @transform_0, window_bounds = array<i64: 2, 64>}, {pipeline_mode = #tpu.pipeline_mode<synchronous>, transform_indices = @transform_1, window_bounds = array<i64: 64, 128>}, {pipeline_mode = #tpu.pipeline_mode<synchronous>, transform_indices = @transform_2, window_bounds = array<i64: 8, 128>}, {transform_indices = @transform_3, window_bounds = array<i64: 8, 128>}, {transform_indices = @transform_4, window_bounds = array<i64: 8, 128>}]} {
    %c0_i32 = arith.constant 0 : i32
    %0 = arith.cmpi eq, %arg1, %c0_i32 : i32
    %1 = arith.extui %0 : i1 to i32
    %c0_i32_0 = arith.constant 0 : i32
    %2 = arith.cmpi ne, %1, %c0_i32_0 : i32
    scf.if %2 {
      %cst_28 = arith.constant 0.000000e+00 : f32
      %66 = vector.broadcast %cst_28 : f32 to vector<1x1xf32>
      %c0_29 = arith.constant 0 : index
      %c0_30 = arith.constant 0 : index
      %67 = vector.load %arg8[%c0_29, %c0_30] : memref<1x1xf32, #tpu.memory_space<vmem>>, vector<1x1xf32>
      tpu.vector_store %arg8[%c0_29, %c0_30], %66 {strides = array<i32>} : memref<1x1xf32, #tpu.memory_space<vmem>>, vector<1x1xf32>,
      %cst_31 = arith.constant 0.000000e+00 : f32
      %68 = vector.broadcast %cst_31 : f32 to vector<1x1xf32>
      %c0_32 = arith.constant 0 : index
      %c0_33 = arith.constant 0 : index
      %69 = vector.load %arg9[%c0_32, %c0_33] : memref<1x1xf32, #tpu.memory_space<vmem>>, vector<1x1xf32>
      tpu.vector_store %arg9[%c0_32, %c0_33], %68 {strides = array<i32>} : memref<1x1xf32, #tpu.memory_space<vmem>>, vector<1x1xf32>,
    } else {
    }
    %c0 = arith.constant 0 : index
    %c0_1 = arith.constant 0 : index
    %3 = vector.load %arg3[%c0, %c0_1] : memref<2x64xf32, #tpu.memory_space<vmem>>, vector<2x64xf32>
    %4 = arith.truncf %3 : vector<2x64xf32> to vector<2x64xbf16>
    %c0_2 = arith.constant 0 : index
    %c0_3 = arith.constant 0 : index
    %5 = vector.load %arg4[%c0_2, %c0_3] : memref<64x128xbf16, #tpu.memory_space<vmem>>, vector<64x128xbf16>
    %cst = arith.constant dense<0.000000e+00> : vector<2x128xf32>
    %6 = tpu.matmul %4, %5, %cst {dimension_numbers = #tpu.dot_dimension_numbers<[1], [0], [0], [1], [0, 0, 1, 1], [], []>} : vector<2x64xbf16>, vector<64x128xbf16>, vector<2x128xf32> -> vector<2x128xf32>
    %c0_4 = arith.constant 0 : index
    %c0_5 = arith.constant 0 : index
    %7 = vector.load %arg5[%c0_4, %c0_5] : memref<8x128xf32, #tpu.memory_space<vmem>>, vector<8x128xf32>
    %8 = vector.extract_strided_slice %7 {offsets = [0, 0], sizes = [1, 128], strides = [1, 1]} : vector<8x128xf32> to vector<1x128xf32>
    %9 = vector.extract_strided_slice %7 {offsets = [1, 0], sizes = [1, 128], strides = [1, 1]} : vector<8x128xf32> to vector<1x128xf32>
    %10 = vector.extract_strided_slice %7 {offsets = [2, 0], sizes = [1, 128], strides = [1, 1]} : vector<8x128xf32> to vector<1x128xf32>
    %11 = vector.broadcast %8 : vector<1x128xf32> to vector<2x128xf32>
    %12 = arith.addf %6, %11 : vector<2x128xf32>
    %c1_i32 = arith.constant 1 : i32
    %13 = arith.muli %arg0, %c1_i32 : i32
    %14 = arith.addi %13, %arg1 : i32
    %15 = tpu.iota {dimensions = array<i32: 0>} : vector<2x1xi32>
    %c2_i32 = arith.constant 2 : i32
    %16 = arith.muli %14, %c2_i32 : i32
    %17 = vector.broadcast %16 : i32 to vector<2x1xi32>
    %18 = arith.addi %15, %17 : vector<2x1xi32>
    %c2_i32_6 = arith.constant 2 : i32
    %19 = vector.broadcast %c2_i32_6 : i32 to vector<2x1xi32>
    %20 = arith.cmpi slt, %18, %19 : vector<2x1xi32>
    %cst_7 = arith.constant dense<0xFF800000> : vector<2xf32>
    %21 = vector.multi_reduction <maximumf>, %12, %cst_7 [1] : vector<2x128xf32> to vector<2xf32>
    %22 = vector.shape_cast %21 : vector<2xf32> to vector<2x1xf32>
    %23 = vector.broadcast %22 : vector<2x1xf32> to vector<2x128xf32>
    %24 = arith.subf %12, %23 : vector<2x128xf32>
    %25 = math.exp %24 : vector<2x128xf32>
    %cst_8 = arith.constant dense<0.000000e+00> : vector<2xf32>
    %26 = vector.multi_reduction <add>, %25, %cst_8 [1] : vector<2x128xf32> to vector<2xf32>
    %27 = vector.shape_cast %26 : vector<2xf32> to vector<2x1xf32>
    %28 = math.log %27 : vector<2x1xf32>
    %29 = arith.addf %22, %28 : vector<2x1xf32>
    %30 = vector.broadcast %9 : vector<1x128xf32> to vector<2x128xf32>
    %31 = arith.mulf %12, %30 : vector<2x128xf32>
    %cst_9 = arith.constant dense<0.000000e+00> : vector<2xf32>
    %32 = vector.multi_reduction <add>, %31, %cst_9 [1] : vector<2x128xf32> to vector<2xf32>
    %33 = vector.shape_cast %32 : vector<2xf32> to vector<2x1xf32>
    %34 = arith.subf %29, %33 : vector<2x1xf32>
    %cst_10 = arith.constant 0.000000e+00 : f32
    %35 = vector.broadcast %cst_10 : f32 to vector<2x1xf32>
    %36 = arith.select %20, %34, %35 : vector<2x1xi1>, vector<2x1xf32>
    %c0_11 = arith.constant 0 : index
    %37 = memref.load %arg2[%c0_11] : memref<1xi32, #tpu.memory_space<smem>>
    %38 = arith.sitofp %37 : i32 to f32
    %39 = vector.broadcast %22 : vector<2x1xf32> to vector<2x128xf32>
    %40 = arith.cmpf oeq, %12, %39 : vector<2x128xf32>
    %cst_12 = arith.constant 1.280000e+02 : f32
    %41 = vector.shape_cast %10 : vector<1x128xf32> to vector<1x128xf32>
    %42 = vector.broadcast %41 : vector<1x128xf32> to vector<2x128xf32>
    %43 = vector.broadcast %cst_12 : f32 to vector<2x128xf32>
    %44 = arith.select %40, %42, %43 : vector<2x128xi1>, vector<2x128xf32>
    %cst_13 = arith.constant dense<0x7F800000> : vector<2xf32>
    %45 = vector.multi_reduction <minimumf>, %44, %cst_13 [1] : vector<2x128xf32> to vector<2xf32>
    %46 = vector.shape_cast %45 : vector<2xf32> to vector<2x1xf32>
    %47 = vector.broadcast %38 : f32 to vector<2x1xf32>
    %48 = arith.cmpf oeq, %46, %47 : vector<2x1xf32>
    %49 = arith.andi %20, %48 : vector<2x1xi1>
    %cst_14 = arith.constant 1.000000e+00 : f32
    %cst_15 = arith.constant 0.000000e+00 : f32
    %50 = vector.broadcast %cst_14 : f32 to vector<2x1xf32>
    %51 = vector.broadcast %cst_15 : f32 to vector<2x1xf32>
    %52 = arith.select %49, %50, %51 : vector<2x1xi1>, vector<2x1xf32>
    %c0_16 = arith.constant 0 : index
    %c0_17 = arith.constant 0 : index
    %53 = vector.load %arg8[%c0_16, %c0_17] : memref<1x1xf32, #tpu.memory_space<vmem>>, vector<1x1xf32>
    %cst_18 = arith.constant dense<0.000000e+00> : vector<1xf32>
    %54 = vector.multi_reduction <add>, %36, %cst_18 [0] : vector<2x1xf32> to vector<1xf32>
    %55 = vector.shape_cast %54 : vector<1xf32> to vector<1x1xf32>
    %56 = arith.addf %53, %55 : vector<1x1xf32>
    %c0_19 = arith.constant 0 : index
    %c0_20 = arith.constant 0 : index
    %57 = vector.load %arg8[%c0_19, %c0_20] : memref<1x1xf32, #tpu.memory_space<vmem>>, vector<1x1xf32>
    tpu.vector_store %arg8[%c0_19, %c0_20], %56 {strides = array<i32>} : memref<1x1xf32, #tpu.memory_space<vmem>>, vector<1x1xf32>,
    %c0_21 = arith.constant 0 : index
    %c0_22 = arith.constant 0 : index
    %58 = vector.load %arg9[%c0_21, %c0_22] : memref<1x1xf32, #tpu.memory_space<vmem>>, vector<1x1xf32>
    %cst_23 = arith.constant dense<0.000000e+00> : vector<1xf32>
    %59 = vector.multi_reduction <add>, %52, %cst_23 [0] : vector<2x1xf32> to vector<1xf32>
    %60 = vector.shape_cast %59 : vector<1xf32> to vector<1x1xf32>
    %61 = arith.addf %58, %60 : vector<1x1xf32>
    %c0_24 = arith.constant 0 : index
    %c0_25 = arith.constant 0 : index
    %62 = vector.load %arg9[%c0_24, %c0_25] : memref<1x1xf32, #tpu.memory_space<vmem>>, vector<1x1xf32>
    tpu.vector_store %arg9[%c0_24, %c0_25], %61 {strides = array<i32>} : memref<1x1xf32, #tpu.memory_space<vmem>>, vector<1x1xf32>,
    %c0_i32_26 = arith.constant 0 : i32
    %63 = arith.cmpi eq, %arg1, %c0_i32_26 : i32
    %64 = arith.extui %63 : i1 to i32
    %c0_i32_27 = arith.constant 0 : i32
    %65 = arith.cmpi ne, %64, %c0_i32_27 : i32
    scf.if %65 {
      %c0_28 = arith.constant 0 : index
      %c0_29 = arith.constant 0 : index
      %66 = vector.load %arg8[%c0_28, %c0_29] : memref<1x1xf32, #tpu.memory_space<vmem>>, vector<1x1xf32>
      %67 = vector.shape_cast %66 : vector<1x1xf32> to vector<1x1xf32>
      %68 = vector.broadcast %67 : vector<1x1xf32> to vector<8x128xf32>
      %c0_30 = arith.constant 0 : index
      %c0_31 = arith.constant 0 : index
      %69 = vector.load %arg6[%c0_30, %c0_31] : memref<8x128xf32, #tpu.memory_space<vmem>>, vector<8x128xf32>
      tpu.vector_store %arg6[%c0_30, %c0_31], %68 {strides = array<i32>} : memref<8x128xf32, #tpu.memory_space<vmem>>, vector<8x128xf32>,
      %c0_32 = arith.constant 0 : index
      %c0_33 = arith.constant 0 : index
      %70 = vector.load %arg9[%c0_32, %c0_33] : memref<1x1xf32, #tpu.memory_space<vmem>>, vector<1x1xf32>
      %71 = vector.shape_cast %70 : vector<1x1xf32> to vector<1x1xf32>
      %72 = vector.broadcast %71 : vector<1x1xf32> to vector<8x128xf32>
      %c0_34 = arith.constant 0 : index
      %c0_35 = arith.constant 0 : index
      %73 = vector.load %arg7[%c0_34, %c0_35] : memref<8x128xf32, #tpu.memory_space<vmem>>, vector<8x128xf32>
      tpu.vector_store %arg7[%c0_34, %c0_35], %72 {strides = array<i32>} : memref<8x128xf32, #tpu.memory_space<vmem>>, vector<8x128xf32>,
    } else {
    }
    return
  }
  func.func @transform_0(%arg0: i32, %arg1: i32, %arg2: memref<1xi32, #tpu.memory_space<smem>>) -> (i32, i32) {
    %c1_i32 = arith.constant 1 : i32
    %0 = arith.muli %arg0, %c1_i32 : i32
    %1 = arith.addi %0, %arg1 : i32
    %c0_i32 = arith.constant 0 : i32
    %2 = arith.minsi %1, %c0_i32 : i32
    %c0_i32_0 = arith.constant 0 : i32
    %c0_i32_1 = arith.constant 0 : i32
    return %2, %c0_i32_0 : i32, i32
  }
  func.func @transform_1(%arg0: i32, %arg1: i32, %arg2: memref<1xi32, #tpu.memory_space<smem>>) -> (i32, i32) {
    %c0_i32 = arith.constant 0 : i32
    %c0_i32_0 = arith.constant 0 : i32
    %c0_i32_1 = arith.constant 0 : i32
    return %c0_i32, %c0_i32_0 : i32, i32
  }
  func.func @transform_2(%arg0: i32, %arg1: i32, %arg2: memref<1xi32, #tpu.memory_space<smem>>) -> (i32, i32) {
    %c0_i32 = arith.constant 0 : i32
    %c0_i32_0 = arith.constant 0 : i32
    %c0_i32_1 = arith.constant 0 : i32
    return %c0_i32, %c0_i32_0 : i32, i32
  }
  func.func @transform_3(%arg0: i32, %arg1: i32, %arg2: memref<1xi32, #tpu.memory_space<smem>>) -> (i32, i32) {
    %c0_i32 = arith.constant 0 : i32
    %c0_i32_0 = arith.constant 0 : i32
    return %arg0, %c0_i32 : i32, i32
  }
  func.func @transform_4(%arg0: i32, %arg1: i32, %arg2: memref<1xi32, #tpu.memory_space<smem>>) -> (i32, i32) {
    %c0_i32 = arith.constant 0 : i32
    %c0_i32_0 = arith.constant 0 : i32
    return %arg0, %c0_i32 : i32, i32
  }
}

module attributes {stable_mosaic.version = 11 : i64} {
  func.func @band_predictor_kernel(%arg0: i32, %arg1: i32, %arg2: memref<1xi32, #tpu.memory_space<smem>>, %arg3: memref<2x64xf32, #tpu.memory_space<vmem>>, %arg4: memref<64x128xbf16, #tpu.memory_space<vmem>>, %arg5: memref<8x128xf32, #tpu.memory_space<vmem>>, %arg6: memref<8x128xf32, #tpu.memory_space<vmem>>, %arg7: memref<8x128xf32, #tpu.memory_space<vmem>>, %arg8: memref<1x1xf32, #tpu.memory_space<vmem>>, %arg9: memref<1x1xf32, #tpu.memory_space<vmem>>) attributes {dimension_semantics = [#tpu.dimension_semantics<parallel>, #tpu.dimension_semantics<arbitrary>], iteration_bounds = array<i64: 1, 1>, scalar_prefetch = 1 : i64, scratch_operands = 2 : i64, tpu.core_type = #tpu.core_type<tc>, window_params = [{transform_indices = @transform_0, window_bounds = array<i64: 2, 64>}, {pipeline_mode = #tpu.pipeline_mode<synchronous>, transform_indices = @transform_1, window_bounds = array<i64: 64, 128>}, {pipeline_mode = #tpu.pipeline_mode<synchronous>, transform_indices = @transform_2, window_bounds = array<i64: 8, 128>}, {transform_indices = @transform_3, window_bounds = array<i64: 8, 128>}, {transform_indices = @transform_4, window_bounds = array<i64: 8, 128>}]} {
    %c0_i32 = arith.constant 0 : i32
    %0 = arith.cmpi eq, %arg1, %c0_i32 : i32
    %1 = arith.extui %0 : i1 to i32
    %c0_i32_0 = arith.constant 0 : i32
    %2 = arith.cmpi ne, %1, %c0_i32_0 : i32
    scf.if %2 {
      %cst_28 = arith.constant 0.000000e+00 : f32
      %66 = vector.broadcast %cst_28 : f32 to vector<1x1xf32>
      %c0_29 = arith.constant 0 : index
      %c0_30 = arith.constant 0 : index
      %67 = vector.load %arg8[%c0_29, %c0_30] : memref<1x1xf32, #tpu.memory_space<vmem>>, vector<1x1xf32>
      tpu.vector_store %arg8[%c0_29, %c0_30], %66 {strides = array<i32>} : memref<1x1xf32, #tpu.memory_space<vmem>>, vector<1x1xf32>,
      %cst_31 = arith.constant 0.000000e+00 : f32
      %68 = vector.broadcast %cst_31 : f32 to vector<1x1xf32>
      %c0_32 = arith.constant 0 : index
      %c0_33 = arith.constant 0 : index
      %69 = vector.load %arg9[%c0_32, %c0_33] : memref<1x1xf32, #tpu.memory_space<vmem>>, vector<1x1xf32>
      tpu.vector_store %arg9[%c0_32, %c0_33], %68 {strides = array<i32>} : memref<1x1xf32, #tpu.memory_space<vmem>>, vector<1x1xf32>,
    } else {
    }
    %c0 = arith.constant 0 : index
    %c0_1 = arith.constant 0 : index
    %3 = vector.load %arg3[%c0, %c0_1] : memref<2x64xf32, #tpu.memory_space<vmem>>, vector<2x64xf32>
    %4 = arith.truncf %3 : vector<2x64xf32> to vector<2x64xbf16>
    %c0_2 = arith.constant 0 : index
    %c0_3 = arith.constant 0 : index
    %5 = vector.load %arg4[%c0_2, %c0_3] : memref<64x128xbf16, #tpu.memory_space<vmem>>, vector<64x128xbf16>
    %cst = arith.constant dense<0.000000e+00> : vector<2x128xf32>
    %6 = tpu.matmul %4, %5, %cst {dimension_numbers = #tpu.dot_dimension_numbers<[1], [0], [0], [1], [0, 0, 1, 1], [], []>} : vector<2x64xbf16>, vector<64x128xbf16>, vector<2x128xf32> -> vector<2x128xf32>
    %c0_4 = arith.constant 0 : index
    %c0_5 = arith.constant 0 : index
    %7 = vector.load %arg5[%c0_4, %c0_5] : memref<8x128xf32, #tpu.memory_space<vmem>>, vector<8x128xf32>
    %8 = vector.extract_strided_slice %7 {offsets = [0, 0], sizes = [1, 128], strides = [1, 1]} : vector<8x128xf32> to vector<1x128xf32>
    %9 = vector.extract_strided_slice %7 {offsets = [1, 0], sizes = [1, 128], strides = [1, 1]} : vector<8x128xf32> to vector<1x128xf32>
    %10 = vector.extract_strided_slice %7 {offsets = [2, 0], sizes = [1, 128], strides = [1, 1]} : vector<8x128xf32> to vector<1x128xf32>
    %11 = vector.broadcast %8 : vector<1x128xf32> to vector<2x128xf32>
    %12 = arith.addf %6, %11 : vector<2x128xf32>
    %c1_i32 = arith.constant 1 : i32
    %13 = arith.muli %arg0, %c1_i32 : i32
    %14 = arith.addi %13, %arg1 : i32
    %15 = tpu.iota {dimensions = array<i32: 0>} : vector<2x1xi32>
    %c2_i32 = arith.constant 2 : i32
    %16 = arith.muli %14, %c2_i32 : i32
    %17 = vector.broadcast %16 : i32 to vector<2x1xi32>
    %18 = arith.addi %15, %17 : vector<2x1xi32>
    %c2_i32_6 = arith.constant 2 : i32
    %19 = vector.broadcast %c2_i32_6 : i32 to vector<2x1xi32>
    %20 = arith.cmpi slt, %18, %19 : vector<2x1xi32>
    %cst_7 = arith.constant dense<0xFF800000> : vector<2xf32>
    %21 = vector.multi_reduction <maximumf>, %12, %cst_7 [1] : vector<2x128xf32> to vector<2xf32>
    %22 = vector.shape_cast %21 : vector<2xf32> to vector<2x1xf32>
    %23 = vector.broadcast %22 : vector<2x1xf32> to vector<2x128xf32>
    %24 = arith.subf %12, %23 : vector<2x128xf32>
    %25 = math.exp %24 : vector<2x128xf32>
    %cst_8 = arith.constant dense<0.000000e+00> : vector<2xf32>
    %26 = vector.multi_reduction <add>, %25, %cst_8 [1] : vector<2x128xf32> to vector<2xf32>
    %27 = vector.shape_cast %26 : vector<2xf32> to vector<2x1xf32>
    %28 = math.log %27 : vector<2x1xf32>
    %29 = arith.addf %22, %28 : vector<2x1xf32>
    %30 = vector.broadcast %9 : vector<1x128xf32> to vector<2x128xf32>
    %31 = arith.mulf %12, %30 : vector<2x128xf32>
    %cst_9 = arith.constant dense<0.000000e+00> : vector<2xf32>
    %32 = vector.multi_reduction <add>, %31, %cst_9 [1] : vector<2x128xf32> to vector<2xf32>
    %33 = vector.shape_cast %32 : vector<2xf32> to vector<2x1xf32>
    %34 = arith.subf %29, %33 : vector<2x1xf32>
    %cst_10 = arith.constant 0.000000e+00 : f32
    %35 = vector.broadcast %cst_10 : f32 to vector<2x1xf32>
    %36 = arith.select %20, %34, %35 : vector<2x1xi1>, vector<2x1xf32>
    %c0_11 = arith.constant 0 : index
    %37 = memref.load %arg2[%c0_11] : memref<1xi32, #tpu.memory_space<smem>>
    %38 = arith.sitofp %37 : i32 to f32
    %39 = vector.broadcast %22 : vector<2x1xf32> to vector<2x128xf32>
    %40 = arith.cmpf oeq, %12, %39 : vector<2x128xf32>
    %cst_12 = arith.constant 1.280000e+02 : f32
    %41 = vector.shape_cast %10 : vector<1x128xf32> to vector<1x128xf32>
    %42 = vector.broadcast %41 : vector<1x128xf32> to vector<2x128xf32>
    %43 = vector.broadcast %cst_12 : f32 to vector<2x128xf32>
    %44 = arith.select %40, %42, %43 : vector<2x128xi1>, vector<2x128xf32>
    %cst_13 = arith.constant dense<0x7F800000> : vector<2xf32>
    %45 = vector.multi_reduction <minimumf>, %44, %cst_13 [1] : vector<2x128xf32> to vector<2xf32>
    %46 = vector.shape_cast %45 : vector<2xf32> to vector<2x1xf32>
    %47 = vector.broadcast %38 : f32 to vector<2x1xf32>
    %48 = arith.cmpf oeq, %46, %47 : vector<2x1xf32>
    %49 = arith.andi %20, %48 : vector<2x1xi1>
    %cst_14 = arith.constant 1.000000e+00 : f32
    %cst_15 = arith.constant 0.000000e+00 : f32
    %50 = vector.broadcast %cst_14 : f32 to vector<2x1xf32>
    %51 = vector.broadcast %cst_15 : f32 to vector<2x1xf32>
    %52 = arith.select %49, %50, %51 : vector<2x1xi1>, vector<2x1xf32>
    %c0_16 = arith.constant 0 : index
    %c0_17 = arith.constant 0 : index
    %53 = vector.load %arg8[%c0_16, %c0_17] : memref<1x1xf32, #tpu.memory_space<vmem>>, vector<1x1xf32>
    %cst_18 = arith.constant dense<0.000000e+00> : vector<1xf32>
    %54 = vector.multi_reduction <add>, %36, %cst_18 [0] : vector<2x1xf32> to vector<1xf32>
    %55 = vector.shape_cast %54 : vector<1xf32> to vector<1x1xf32>
    %56 = arith.addf %53, %55 : vector<1x1xf32>
    %c0_19 = arith.constant 0 : index
    %c0_20 = arith.constant 0 : index
    %57 = vector.load %arg8[%c0_19, %c0_20] : memref<1x1xf32, #tpu.memory_space<vmem>>, vector<1x1xf32>
    tpu.vector_store %arg8[%c0_19, %c0_20], %56 {strides = array<i32>} : memref<1x1xf32, #tpu.memory_space<vmem>>, vector<1x1xf32>,
    %c0_21 = arith.constant 0 : index
    %c0_22 = arith.constant 0 : index
    %58 = vector.load %arg9[%c0_21, %c0_22] : memref<1x1xf32, #tpu.memory_space<vmem>>, vector<1x1xf32>
    %cst_23 = arith.constant dense<0.000000e+00> : vector<1xf32>
    %59 = vector.multi_reduction <add>, %52, %cst_23 [0] : vector<2x1xf32> to vector<1xf32>
    %60 = vector.shape_cast %59 : vector<1xf32> to vector<1x1xf32>
    %61 = arith.addf %58, %60 : vector<1x1xf32>
    %c0_24 = arith.constant 0 : index
    %c0_25 = arith.constant 0 : index
    %62 = vector.load %arg9[%c0_24, %c0_25] : memref<1x1xf32, #tpu.memory_space<vmem>>, vector<1x1xf32>
    tpu.vector_store %arg9[%c0_24, %c0_25], %61 {strides = array<i32>} : memref<1x1xf32, #tpu.memory_space<vmem>>, vector<1x1xf32>,
    %c0_i32_26 = arith.constant 0 : i32
    %63 = arith.cmpi eq, %arg1, %c0_i32_26 : i32
    %64 = arith.extui %63 : i1 to i32
    %c0_i32_27 = arith.constant 0 : i32
    %65 = arith.cmpi ne, %64, %c0_i32_27 : i32
    scf.if %65 {
      %c0_28 = arith.constant 0 : index
      %c0_29 = arith.constant 0 : index
      %66 = vector.load %arg8[%c0_28, %c0_29] : memref<1x1xf32, #tpu.memory_space<vmem>>, vector<1x1xf32>
      %67 = vector.shape_cast %66 : vector<1x1xf32> to vector<1x1xf32>
      %68 = vector.broadcast %67 : vector<1x1xf32> to vector<8x128xf32>
      %c0_30 = arith.constant 0 : index
      %c0_31 = arith.constant 0 : index
      %69 = vector.load %arg6[%c0_30, %c0_31] : memref<8x128xf32, #tpu.memory_space<vmem>>, vector<8x128xf32>
      tpu.vector_store %arg6[%c0_30, %c0_31], %68 {strides = array<i32>} : memref<8x128xf32, #tpu.memory_space<vmem>>, vector<8x128xf32>,
      %c0_32 = arith.constant 0 : index
      %c0_33 = arith.constant 0 : index
      %70 = vector.load %arg9[%c0_32, %c0_33] : memref<1x1xf32, #tpu.memory_space<vmem>>, vector<1x1xf32>
      %71 = vector.shape_cast %70 : vector<1x1xf32> to vector<1x1xf32>
      %72 = vector.broadcast %71 : vector<1x1xf32> to vector<8x128xf32>
      %c0_34 = arith.constant 0 : index
      %c0_35 = arith.constant 0 : index
      %73 = vector.load %arg7[%c0_34, %c0_35] : memref<8x128xf32, #tpu.memory_space<vmem>>, vector<8x128xf32>
      tpu.vector_store %arg7[%c0_34, %c0_35], %72 {strides = array<i32>} : memref<8x128xf32, #tpu.memory_space<vmem>>, vector<8x128xf32>,
    } else {
    }
    return
  }
  func.func @transform_0(%arg0: i32, %arg1: i32, %arg2: memref<1xi32, #tpu.memory_space<smem>>) -> (i32, i32) {
    %c1_i32 = arith.constant 1 : i32
    %0 = arith.muli %arg0, %c1_i32 : i32
    %1 = arith.addi %0, %arg1 : i32
    %c0_i32 = arith.constant 0 : i32
    %2 = arith.minsi %1, %c0_i32 : i32
    %c0_i32_0 = arith.constant 0 : i32
    %c0_i32_1 = arith.constant 0 : i32
    return %2, %c0_i32_0 : i32, i32
  }
  func.func @transform_1(%arg0: i32, %arg1: i32, %arg2: memref<1xi32, #tpu.memory_space<smem>>) -> (i32, i32) {
    %c0_i32 = arith.constant 0 : i32
    %c0_i32_0 = arith.constant 0 : i32
    %c0_i32_1 = arith.constant 0 : i32
    return %c0_i32, %c0_i32_0 : i32, i32
  }
  func.func @transform_2(%arg0: i32, %arg1: i32, %arg2: memref<1xi32, #tpu.memory_space<smem>>) -> (i32, i32) {
    %c0_i32 = arith.constant 0 : i32
    %c0_i32_0 = arith.constant 0 : i32
    %c0_i32_1 = arith.constant 0 : i32
    return %c0_i32, %c0_i32_0 : i32, i32
  }
  func.func @transform_3(%arg0: i32, %arg1: i32, %arg2: memref<1xi32, #tpu.memory_space<smem>>) -> (i32, i32) {
    %c0_i32 = arith.constant 0 : i32
    %c0_i32_0 = arith.constant 0 : i32
    return %arg0, %c0_i32 : i32, i32
  }
  func.func @transform_4(%arg0: i32, %arg1: i32, %arg2: memref<1xi32, #tpu.memory_space<smem>>) -> (i32, i32) {
    %c0_i32 = arith.constant 0 : i32
    %c0_i32_0 = arith.constant 0 : i32
    return %arg0, %c0_i32 : i32, i32
  }
}

</mosaic_0001>

<llo_original>
// kernel: tpu_custom_call.1
$region0: #{tpu_custom_call.1}
  #allocation0 [shape = 'u32[]', space=smem, size = 0x4, offset = 0x4, fixed_abs, tag = 'smem constant byte address 0x4 - core index']
  #allocation1 [shape = 'u32[144,128]{1,0:T(1,128)}', space=vmem, size = 0x12000, scoped, tag = 'internal scratch']
  #allocation2 [shape = 'f32[1,1]{1,0:T(1,128)}', space=vmem, size = 0x200, scoped, tag = 'scratch operand']
  #allocation3 [shape = 'f32[1,1]{1,0:T(1,128)}', space=vmem, size = 0x200, scoped, tag = 'scratch operand']
  #allocation4 [shape = 's32[1]{0}', space=sflag, size = 0x4, scoped, tag = 'scoped memory for tpu_custom_call.1']
  #allocation5 [shape = 's32[1]{0:T(128)S(6)}', space=smem, size = 0x200, scoped, tag = 'prefetched SMEM operand 0']
  %s0 = inlined_call_operand.<no memory space> [shape: s32[1], index: 0, kind: input, shape index: {}]
  %s1 = inlined_call_operand.hbm [shape: f32[2,64], index: 1, kind: input, shape index: {}]
  %s2 = inlined_call_operand.hbm [shape: bf16[64,128], index: 2, kind: input, shape index: {}]
  %s3 = inlined_call_operand.hbm [shape: f32[8,128], index: 3, kind: input, shape index: {}]
  %s4 = inlined_call_operand.hbm [shape: f32[8,128], index: 4, kind: output, shape index: {0}]
  %s5 = inlined_call_operand.hbm [shape: f32[8,128], index: 5, kind: output, shape index: {1}]
  %6 = xla_tuple %s4, %s5
  %s7 = sld [smem:[#allocation0]]
  $region50: #{tpu_custom_call.1} parent=0
    _
  %s9 = ssub.s32 1, %s7
  %s10 = scalar_select 0, %s9, %s7
  %11 = sst [smem:[#allocation5]] %s0
  $region1: #{tpu_custom_call.1} parent=0
    #allocation6 [shape = 'u8[1024]{0}', space=vmem, size = 0x400, scoped, tag = 'input window, operand 1, single buffered']
    #allocation7 [shape = 's32[1]{0}', space=sflag, size = 0x4, scoped, tag = 'scoped memory for tpu_custom_call.1']
    #allocation8 [shape = 's32[1]{0}', space=sflag, size = 0x4, scoped, tag = 'scoped memory for tpu_custom_call.1']
    #allocation9 [shape = 'u8[16384]{0}', space=vmem, size = 0x4000, scoped, tag = 'input window, operand 2, single buffered']
    #allocation10 [shape = 's32[1]{0}', space=sflag, size = 0x4, scoped, tag = 'scoped memory for tpu_custom_call.1']
    #allocation11 [shape = 'u8[4096]{0}', space=vmem, size = 0x1000, scoped, tag = 'input window, operand 3, single buffered']
    #allocation12 [shape = 'u8[4096]{0}', space=vmem, size = 0x1000, scoped, tag = 'output window, operand 0, single buffered']
    #allocation13 [shape = 'u8[4096]{0}', space=vmem, size = 0x1000, scoped, tag = 'output window, operand 1, single buffered']
    #allocation14 [shape = 's32[1]{0}', space=sflag, size = 0x4, scoped, tag = 'scoped memory for tpu_custom_call.1']
    %12 = vsyncpa [#allocation7], 0
    %13 = vsyncpa [#allocation10], 0
    %14 = vsyncpa [#allocation8], 0
    %15 = vsyncpa [#allocation14], 0
    // Predicated region
    $region2: #{tpu_custom_call.1} parent=1 // pred_check
      _
    $region3: #{tpu_custom_call.1} parent=1 // pred_check_branch
      %17 = sbr.rel (0) target = $region5
    $region4: #{tpu_custom_call.1} parent=1 // pred_region
      %s18 = sadd.s32 0, 0
      %p19 = scmp.lt.s32.totalorder %s18, 0
      %s20 = scalar_select %p19, %s18, 0
      %s22 = ssub.s32 32, 32
      %23 = vsyncadd [#allocation7], %s22
      %s24 = smul.addr %s20, 32
      %s25 = scalar_lea.hbm %s1, %s24
      %s27 = sshll.u32 [#allocation6], 4
      %s28 = int_to_ptr.vmem [resolvable:$true] %s27
      %30 = dma.hbm_to_vmem [thread:$0]  %s25, 32, %s28, [#allocation7]
    $region5: #{tpu_custom_call.1} parent=1 // pred_fallthru
      _
    // Predicated region
    $region6: #{tpu_custom_call.1} parent=1 // pred_check
      _
    $region7: #{tpu_custom_call.1} parent=1 // pred_check_branch
      %32 = sbr.rel (0) target = $region9
    $region8: #{tpu_custom_call.1} parent=1 // pred_region
      %s34 = ssub.s32 512, 512
      %35 = vsyncadd [#allocation10], %s34
      %s36 = sshll.u32 [#allocation9], 4
      %s37 = int_to_ptr.vmem [resolvable:$true] %s36
      %42 = dma.hbm_to_vmem [thread:$0]  %s2, 512, %s37, [#allocation10], 64, 64, 4
    $region9: #{tpu_custom_call.1} parent=1 // pred_fallthru
      _
    // Predicated region
    $region10: #{tpu_custom_call.1} parent=1 // pred_check
      _
    $region11: #{tpu_custom_call.1} parent=1 // pred_check_branch
      %44 = sbr.rel (0) target = $region13
    $region12: #{tpu_custom_call.1} parent=1 // pred_region
      %s46 = ssub.s32 128, 128
      %47 = vsyncadd [#allocation10], %s46
      %s49 = sshll.u32 [#allocation11], 4
      %s50 = int_to_ptr.vmem [resolvable:$true] %s49
      %52 = dma.hbm_to_vmem [thread:$0]  %s3, 128, %s50, [#allocation10]
    $region13: #{tpu_custom_call.1} parent=1 // pred_fallthru
      _
    // Predicated region
    $region14: #{tpu_custom_call.1} parent=1 // pred_check
      _
    $region15: #{tpu_custom_call.1} parent=1 // pred_check_branch
      %54 = sbr.rel (0) target = $region17
    $region16: #{tpu_custom_call.1} parent=1 // pred_region
      %55 = dma.done [#allocation7], 32
    $region17: #{tpu_custom_call.1} parent=1 // pred_fallthru
      _
    // Predicated region
    $region18: #{tpu_custom_call.1} parent=1 // pred_check
      _
    $region19: #{tpu_custom_call.1} parent=1 // pred_check_branch
      %57 = sbr.rel (0) target = $region21
    $region20: #{tpu_custom_call.1} parent=1 // pred_region
      %58 = dma.done [#allocation10], 512
    $region21: #{tpu_custom_call.1} parent=1 // pred_fallthru
      _
    // Predicated region
    $region22: #{tpu_custom_call.1} parent=1 // pred_check
      _
    $region23: #{tpu_custom_call.1} parent=1 // pred_check_branch
      %60 = sbr.rel (0) target = $region25
    $region24: #{tpu_custom_call.1} parent=1 // pred_region
      %61 = dma.done [#allocation10], 128
    $region25: #{tpu_custom_call.1} parent=1 // pred_fallthru
      _
    %s62 = sadd.s32 0, 0
    %p63 = scmp.lt.s32.totalorder %s62, 0
    %s64 = scalar_select %p63, %s62, 0
    %p66 = scmp.eq.s32.totalorder 0, 0
    // Predicated region
    $region26: #{tpu_custom_call.1} parent=1 // pred_check
      %p67 = pneg %p66
    $region27: #{tpu_custom_call.1} parent=1 // pred_check_branch
      %69 = sbr.rel (%p67) target = $region29
    $region28: #{tpu_custom_call.1} parent=1 // pred_region
      %vm70 = vcmask 0
      %71 = vst.msk [vmem:[#allocation2] sm:$0x1] %vm70, 0.0
      %72 = vst.msk [vmem:[#allocation3] sm:$0x1] %vm70, 0.0
    $region29: #{tpu_custom_call.1} parent=1 // pred_fallthru
      _
    %v73 = vld [vmem:[#allocation6] sm:$0x3]
    %v74 = vpack.c.bf16 %v73, %v73
    %v75 = vld [vmem:[#allocation9] sm:$0xf]
    %v76 = vld [vmem:[#allocation9 + $0x4] sm:$0xf]
    %v77 = vld [vmem:[#allocation9 + $0x8] sm:$0xf]
    %v78 = vld [vmem:[#allocation9 + $0xc] sm:$0xf]
    %v79 = vld [vmem:[#allocation9 + $0x10] sm:$0xf]
    %v80 = vld [vmem:[#allocation9 + $0x14] sm:$0xf]
    %v81 = vld [vmem:[#allocation9 + $0x18] sm:$0xf]
    %v82 = vld [vmem:[#allocation9 + $0x1c] sm:$0xf]
    %v83 = vld [vmem:[#allocation11] sm:$0xff]
    %v84 = vlaneseq
    %v85 = vshrl.u32 %v84, 7
    %v86 = vsub.s32 0, %v85
    %v87 = vrot.slane %v83, %v86
    %v96 = vunpack.c.l.b16 %v75
    %v97 = vunpack.c.l.b16 %v76
    %v98 = vunpack.c.l.b16 %v77
    %v99 = vunpack.c.l.b16 %v78
    %v100 = vunpack.c.l.b16 %v79
    %v101 = vunpack.c.l.b16 %v80
    %v102 = vunpack.c.l.b16 %v81
    %v103 = vunpack.c.l.b16 %v82
    %v104 = vpack.c.b16 %v97, %v96
    %v105 = vpack.c.b16 %v99, %v98
    %v106 = vpack.c.b16 %v101, %v100
    %v107 = vpack.c.b16 %v103, %v102
    %vm112 = vcmask 523264
    %v114 = vsel %vm112, %v74, 0
    %116 = vmatprep.subr.bf16.mxu0 0
    %117 = vmatpush1.bf16.msra.mxu0 %v104
    %118 = vmatprep.subr.bf16.mxu0 0
    %119 = vmatpush1.bf16.msra.mxu0 %v105
    %120 = vmatprep.subr.bf16.mxu0 0
    %121 = vmatpush1.bf16.msra.mxu0 %v106
    %122 = vmatprep.subr.bf16.mxu0 0
    %123 = vmatpush1.bf16.msra.mxu0 %v107
    %124 = vmatprep.subr.bf16.mxu0 0
    %125 = vmatpush1.bf16.msra.mxu0 0
    %126 = vmatprep.subr.bf16.mxu0 0
    %127 = vmatpush1.bf16.msra.mxu0 0
    %128 = vmatprep.subr.bf16.mxu0 0
    %129 = vmatpush1.bf16.msra.mxu0 0
    %130 = vmatprep.subr.bf16.mxu0 0
    %131 = vmatpush1.bf16.msra.mxu0 0
    %132 = vmatprep.subr.bf16.mxu0 0
    %133 = vmatpush1.bf16.msra.mxu0 0
    %134 = vmatprep.subr.bf16.mxu0 0
    %135 = vmatpush1.bf16.msra.mxu0 0
    %136 = vmatprep.subr.bf16.mxu0 0
    %137 = vmatpush1.bf16.msra.mxu0 0
    %138 = vmatprep.subr.bf16.mxu0 0
    %139 = vmatpush1.bf16.msra.mxu0 0
    %140 = vmatprep.subr.bf16.mxu0 0
    %141 = vmatpush1.bf16.msra.mxu0 0
    %142 = vmatprep.subr.bf16.mxu0 0
    %143 = vmatpush1.bf16.msra.mxu0 0
    %144 = vmatprep.subr.bf16.mxu0 0
    %145 = vmatpush1.bf16.msra.mxu0 0
    %146 = vmatprep.subr.bf16.mxu0 0
    %147 = vmatpush1.bf16.msra.mxu0 0
    %148 = vmatprep.mubr.bf16.mxu0 0
    %149 = vmatmul.mubr.bf16.gmra.mrb[0].mxu0 %v114
    %v150 = vpop.f32.mrb[0].mxu0
    %v151 = vadd.f32 %v87, %v150
    %v152 = vpop.f32.mrb[0].mxu0
    %v153 = vpop.f32.mrb[0].mxu0
    %v154 = vpop.f32.mrb[0].mxu0
    %155 = vdwg.mxu0
    %s156 = sadd.s32 0, 0
    %v157 = vlaneseq
    %v158 = vshrl.u32 %v157, 7
    %s159 = smul.u32 %s156, 2
    %v160 = vstv %s159
    %v161 = vadd.s32 %v158, %v160
    %vm162 = vcmp.lt.s32.totalorder %v161, 2
    %vm163 = vcmask 1041408
    %v164 = vsel %vm163, %v151, -inf
    %165 = vmax.xlane.f32.xlu0 %v164
    %v166 = vpop.xlane.xlu0 %165
    %v167 = vsub.f32 %v151, %v166
    %v168 = vmul.f32 %v167, 1.442695
    %v169 = vpow.pop %v168
    %v170 = vsel %vm163, %v169, 0.0
    %171 = vadd.xlane.f32.xlu0 %v170
    %v172 = vpop.xlane.xlu0 %171
    %v173 = vlog2.pop %v172
    %v174 = vmul.f32 %v173, 0.6931472
    %v175 = vadd.f32 %v166, %v174
    %v176 = vlaneseq
    %v177 = vshrl.u32 %v176, 7
    %v178 = vsub.s32 1, %v177
    %v179 = vrot.slane %v83, %v178
    %v180 = vmul.f32 %v151, %v179
    %v181 = vsel %vm163, %v180, 0.0
    %182 = vadd.xlane.f32.xlu0 %v181
    %v183 = vpop.xlane.xlu0 %182
    %v184 = vsub.f32 %v175, %v183
    %v185 = vsel %vm162, %v184, 0.0
    %s186 = sld [smem:[#allocation5]]
    %s187 = scvt.s32.f32 %s186
    %vm188 = vcmp.eq.f32.partialorder %v151, %v166
    %v189 = vlaneseq
    %v190 = vshrl.u32 %v189, 7
    %v191 = vsub.s32 2, %v190
    %v192 = vrot.slane %v83, %v191
    %v193 = vsel %vm188, %v192, 128.0
    %v194 = vsel %vm163, %v193, inf
    %195 = vmin.xlane.f32.xlu0 %v194
    %v196 = vpop.xlane.xlu0 %195
    %v197 = vstv %s187
    %vm198 = vcmp.eq.f32.partialorder %v196, %v197
    %vm199 = vmand %vm162, %vm198
    %v200 = vsel %vm199, 1.0, 0.0
    %v201 = vld [vmem:[#allocation2] sm:$0x1]
    %v202 = vsel %vm163, %v185, 0.0
    %v203 = vrot.slane %v202, 4
    %v204 = vadd.f32 %v202, %v203
    %v205 = vrot.slane %v204, 2
    %v206 = vadd.f32 %v204, %v205
    %v207 = vrot.slane %v206, 1
    %v208 = vadd.f32 %v206, %v207
    %v209 = vadd.f32 %v201, %v208
    %vm210 = vcmask 0
    %211 = vst.msk [vmem:[#allocation2] sm:$0x1] %vm210, %v209
    %v212 = vld [vmem:[#allocation3] sm:$0x1]
    %v213 = vsel %vm163, %v200, 0.0
    %v214 = vrot.slane %v213, 4
    %v215 = vadd.f32 %v213, %v214
    %v216 = vrot.slane %v215, 2
    %v217 = vadd.f32 %v215, %v216
    %v218 = vrot.slane %v217, 1
    %v219 = vadd.f32 %v217, %v218
    %v220 = vadd.f32 %v212, %v219
    %221 = vst.msk [vmem:[#allocation3] sm:$0x1] %vm210, %v220
    // Predicated region
    $region30: #{tpu_custom_call.1} parent=1 // pred_check
      %p222 = pneg %p66
    $region31: #{tpu_custom_call.1} parent=1 // pred_check_branch
      %224 = sbr.rel (%p222) target = $region33
    $region32: #{tpu_custom_call.1} parent=1 // pred_region
      %v225 = vld [vmem:[#allocation2] sm:$0x1]
      %v227 = vlaneseq
      %v228 = vshrl.u32 %v227, 7
      %v229 = vsub.s32 0, %v228
      %v230 = vrot.slane %v225, %v229
      %231 = vset.pattern.permute.xlu0 0
      %232 = vperm.xlu0 %231, %v230
      %v233 = vpop.permute.xlu0 %232
      %235 = vst [vmem:[#allocation12] sm:$0xff] %v233
      %v236 = vld [vmem:[#allocation3] sm:$0x1]
      %v238 = vlaneseq
      %v239 = vshrl.u32 %v238, 7
      %v240 = vsub.s32 0, %v239
      %v241 = vrot.slane %v236, %v240
      %242 = vset.pattern.permute.xlu0 0
      %243 = vperm.xlu0 %242, %v241
      %v244 = vpop.permute.xlu0 %243
      %246 = vst [vmem:[#allocation13] sm:$0xff] %v244
    $region33: #{tpu_custom_call.1} parent=1 // pred_fallthru
      _
    // Predicated region
    $region34: #{tpu_custom_call.1} parent=1 // pred_check
      _
    $region35: #{tpu_custom_call.1} parent=1 // pred_check_branch
      %248 = sbr.rel (0) target = $region37
    $region36: #{tpu_custom_call.1} parent=1 // pred_region
      %s250 = ssub.s32 128, 128
      %251 = vsyncadd [#allocation8], %s250
      %s253 = sshll.u32 [#allocation12], 4
      %s254 = int_to_ptr.vmem [resolvable:$true] %s253
      %256 = dma.vmem_to_hbm [thread:$0]  %s254, 128, %s4, [#allocation8]
    $region37: #{tpu_custom_call.1} parent=1 // pred_fallthru
      _
    // Predicated region
    $region38: #{tpu_custom_call.1} parent=1 // pred_check
      _
    $region39: #{tpu_custom_call.1} parent=1 // pred_check_branch
      %258 = sbr.rel (0) target = $region41
    $region40: #{tpu_custom_call.1} parent=1 // pred_region
      %s260 = ssub.s32 128, 128
      %261 = vsyncadd [#allocation14], %s260
      %s263 = sshll.u32 [#allocation13], 4
      %s264 = int_to_ptr.vmem [resolvable:$true] %s263
      %266 = dma.vmem_to_hbm [thread:$0]  %s264, 128, %s5, [#allocation14]
    $region41: #{tpu_custom_call.1} parent=1 // pred_fallthru
      _
    // Predicated region
    $region42: #{tpu_custom_call.1} parent=1 // pred_check
      _
    $region43: #{tpu_custom_call.1} parent=1 // pred_check_branch
      %268 = sbr.rel (0) target = $region45
    $region44: #{tpu_custom_call.1} parent=1 // pred_region
      %269 = dma.done [#allocation8], 128
    $region45: #{tpu_custom_call.1} parent=1 // pred_fallthru
      _
    // Predicated region
    $region46: #{tpu_custom_call.1} parent=1 // pred_check
      _
    $region47: #{tpu_custom_call.1} parent=1 // pred_check_branch
      %271 = sbr.rel (0) target = $region49
    $region48: #{tpu_custom_call.1} parent=1 // pred_region
      %272 = dma.done [#allocation14], 128
    $region49: #{tpu_custom_call.1} parent=1 // pred_fallthru
      _
    %273 = vsyncpa [#allocation7], 1
    %274 = vsyncpa [#allocation10], 1
    %275 = vsyncpa [#allocation8], 1
    %276 = vsyncpa [#allocation14], 1

// kernel: tpu_custom_call.1
$region0: #{tpu_custom_call.1}
  #allocation0 [shape = 'u32[]', space=smem, size = 0x4, offset = 0x4, fixed_abs, tag = 'smem constant byte address 0x4 - core index']
  #allocation1 [shape = 'u32[144,128]{1,0:T(1,128)}', space=vmem, size = 0x12000, scoped, tag = 'internal scratch']
  #allocation2 [shape = 'f32[1,1]{1,0:T(1,128)}', space=vmem, size = 0x200, scoped, tag = 'scratch operand']
  #allocation3 [shape = 'f32[1,1]{1,0:T(1,128)}', space=vmem, size = 0x200, scoped, tag = 'scratch operand']
  #allocation4 [shape = 's32[1]{0}', space=sflag, size = 0x4, scoped, tag = 'scoped memory for tpu_custom_call.1']
  #allocation5 [shape = 's32[1]{0:T(128)S(6)}', space=smem, size = 0x200, scoped, tag = 'prefetched SMEM operand 0']
  %s0 = inlined_call_operand.<no memory space> [shape: s32[1], index: 0, kind: input, shape index: {}]
  %s1 = inlined_call_operand.hbm [shape: f32[2,64], index: 1, kind: input, shape index: {}]
  %s2 = inlined_call_operand.hbm [shape: bf16[64,128], index: 2, kind: input, shape index: {}]
  %s3 = inlined_call_operand.hbm [shape: f32[8,128], index: 3, kind: input, shape index: {}]
  %s4 = inlined_call_operand.hbm [shape: f32[8,128], index: 4, kind: output, shape index: {0}]
  %s5 = inlined_call_operand.hbm [shape: f32[8,128], index: 5, kind: output, shape index: {1}]
  %6 = xla_tuple %s4, %s5
  %s7 = sld [smem:[#allocation0]]
  $region50: #{tpu_custom_call.1} parent=0
    _
  %s9 = ssub.s32 1, %s7
  %s10 = scalar_select 0, %s9, %s7
  %11 = sst [smem:[#allocation5]] %s0
  $region1: #{tpu_custom_call.1} parent=0
    #allocation6 [shape = 'u8[1024]{0}', space=vmem, size = 0x400, scoped, tag = 'input window, operand 1, single buffered']
    #allocation7 [shape = 's32[1]{0}', space=sflag, size = 0x4, scoped, tag = 'scoped memory for tpu_custom_call.1']
    #allocation8 [shape = 's32[1]{0}', space=sflag, size = 0x4, scoped, tag = 'scoped memory for tpu_custom_call.1']
    #allocation9 [shape = 'u8[16384]{0}', space=vmem, size = 0x4000, scoped, tag = 'input window, operand 2, single buffered']
    #allocation10 [shape = 's32[1]{0}', space=sflag, size = 0x4, scoped, tag = 'scoped memory for tpu_custom_call.1']
    #allocation11 [shape = 'u8[4096]{0}', space=vmem, size = 0x1000, scoped, tag = 'input window, operand 3, single buffered']
    #allocation12 [shape = 'u8[4096]{0}', space=vmem, size = 0x1000, scoped, tag = 'output window, operand 0, single buffered']
    #allocation13 [shape = 'u8[4096]{0}', space=vmem, size = 0x1000, scoped, tag = 'output window, operand 1, single buffered']
    #allocation14 [shape = 's32[1]{0}', space=sflag, size = 0x4, scoped, tag = 'scoped memory for tpu_custom_call.1']
    %12 = vsyncpa [#allocation7], 0
    %13 = vsyncpa [#allocation10], 0
    %14 = vsyncpa [#allocation8], 0
    %15 = vsyncpa [#allocation14], 0
    // Predicated region
    $region2: #{tpu_custom_call.1} parent=1 // pred_check
      _
    $region3: #{tpu_custom_call.1} parent=1 // pred_check_branch
      %17 = sbr.rel (0) target = $region5
    $region4: #{tpu_custom_call.1} parent=1 // pred_region
      %s18 = sadd.s32 0, 0
      %p19 = scmp.lt.s32.totalorder %s18, 0
      %s20 = scalar_select %p19, %s18, 0
      %s22 = ssub.s32 32, 32
      %23 = vsyncadd [#allocation7], %s22
      %s24 = smul.addr %s20, 32
      %s25 = scalar_lea.hbm %s1, %s24
      %s27 = sshll.u32 [#allocation6], 4
      %s28 = int_to_ptr.vmem [resolvable:$true] %s27
      %30 = dma.hbm_to_vmem [thread:$0]  %s25, 32, %s28, [#allocation7]
    $region5: #{tpu_custom_call.1} parent=1 // pred_fallthru
      _
    // Predicated region
    $region6: #{tpu_custom_call.1} parent=1 // pred_check
      _
    $region7: #{tpu_custom_call.1} parent=1 // pred_check_branch
      %32 = sbr.rel (0) target = $region9
    $region8: #{tpu_custom_call.1} parent=1 // pred_region
      %s34 = ssub.s32 512, 512
      %35 = vsyncadd [#allocation10], %s34
      %s36 = sshll.u32 [#allocation9], 4
      %s37 = int_to_ptr.vmem [resolvable:$true] %s36
      %42 = dma.hbm_to_vmem [thread:$0]  %s2, 512, %s37, [#allocation10], 64, 64, 4
    $region9: #{tpu_custom_call.1} parent=1 // pred_fallthru
      _
    // Predicated region
    $region10: #{tpu_custom_call.1} parent=1 // pred_check
      _
    $region11: #{tpu_custom_call.1} parent=1 // pred_check_branch
      %44 = sbr.rel (0) target = $region13
    $region12: #{tpu_custom_call.1} parent=1 // pred_region
      %s46 = ssub.s32 128, 128
      %47 = vsyncadd [#allocation10], %s46
      %s49 = sshll.u32 [#allocation11], 4
      %s50 = int_to_ptr.vmem [resolvable:$true] %s49
      %52 = dma.hbm_to_vmem [thread:$0]  %s3, 128, %s50, [#allocation10]
    $region13: #{tpu_custom_call.1} parent=1 // pred_fallthru
      _
    // Predicated region
    $region14: #{tpu_custom_call.1} parent=1 // pred_check
      _
    $region15: #{tpu_custom_call.1} parent=1 // pred_check_branch
      %54 = sbr.rel (0) target = $region17
    $region16: #{tpu_custom_call.1} parent=1 // pred_region
      %55 = dma.done [#allocation7], 32
    $region17: #{tpu_custom_call.1} parent=1 // pred_fallthru
      _
    // Predicated region
    $region18: #{tpu_custom_call.1} parent=1 // pred_check
      _
    $region19: #{tpu_custom_call.1} parent=1 // pred_check_branch
      %57 = sbr.rel (0) target = $region21
    $region20: #{tpu_custom_call.1} parent=1 // pred_region
      %58 = dma.done [#allocation10], 512
    $region21: #{tpu_custom_call.1} parent=1 // pred_fallthru
      _
    // Predicated region
    $region22: #{tpu_custom_call.1} parent=1 // pred_check
      _
    $region23: #{tpu_custom_call.1} parent=1 // pred_check_branch
      %60 = sbr.rel (0) target = $region25
    $region24: #{tpu_custom_call.1} parent=1 // pred_region
      %61 = dma.done [#allocation10], 128
    $region25: #{tpu_custom_call.1} parent=1 // pred_fallthru
      _
    %s62 = sadd.s32 0, 0
    %p63 = scmp.lt.s32.totalorder %s62, 0
    %s64 = scalar_select %p63, %s62, 0
    %p66 = scmp.eq.s32.totalorder 0, 0
    // Predicated region
    $region26: #{tpu_custom_call.1} parent=1 // pred_check
      %p67 = pneg %p66
    $region27: #{tpu_custom_call.1} parent=1 // pred_check_branch
      %69 = sbr.rel (%p67) target = $region29
    $region28: #{tpu_custom_call.1} parent=1 // pred_region
      %vm70 = vcmask 0
      %71 = vst.msk [vmem:[#allocation2] sm:$0x1] %vm70, 0.0
      %72 = vst.msk [vmem:[#allocation3] sm:$0x1] %vm70, 0.0
    $region29: #{tpu_custom_call.1} parent=1 // pred_fallthru
      _
    %v73 = vld [vmem:[#allocation6] sm:$0x3]
    %v74 = vpack.c.bf16 %v73, %v73
    %v75 = vld [vmem:[#allocation9] sm:$0xf]
    %v76 = vld [vmem:[#allocation9 + $0x4] sm:$0xf]
    %v77 = vld [vmem:[#allocation9 + $0x8] sm:$0xf]
    %v78 = vld [vmem:[#allocation9 + $0xc] sm:$0xf]
    %v79 = vld [vmem:[#allocation9 + $0x10] sm:$0xf]
    %v80 = vld [vmem:[#allocation9 + $0x14] sm:$0xf]
    %v81 = vld [vmem:[#allocation9 + $0x18] sm:$0xf]
    %v82 = vld [vmem:[#allocation9 + $0x1c] sm:$0xf]
    %v83 = vld [vmem:[#allocation11] sm:$0xff]
    %v84 = vlaneseq
    %v85 = vshrl.u32 %v84, 7
    %v86 = vsub.s32 0, %v85
    %v87 = vrot.slane %v83, %v86
    %v96 = vunpack.c.l.b16 %v75
    %v97 = vunpack.c.l.b16 %v76
    %v98 = vunpack.c.l.b16 %v77
    %v99 = vunpack.c.l.b16 %v78
    %v100 = vunpack.c.l.b16 %v79
    %v101 = vunpack.c.l.b16 %v80
    %v102 = vunpack.c.l.b16 %v81
    %v103 = vunpack.c.l.b16 %v82
    %v104 = vpack.c.b16 %v97, %v96
    %v105 = vpack.c.b16 %v99, %v98
    %v106 = vpack.c.b16 %v101, %v100
    %v107 = vpack.c.b16 %v103, %v102
    %vm112 = vcmask 523264
    %v114 = vsel %vm112, %v74, 0
    %116 = vmatprep.subr.bf16.mxu0 0
    %117 = vmatpush1.bf16.msra.mxu0 %v104
    %118 = vmatprep.subr.bf16.mxu0 0
    %119 = vmatpush1.bf16.msra.mxu0 %v105
    %120 = vmatprep.subr.bf16.mxu0 0
    %121 = vmatpush1.bf16.msra.mxu0 %v106
    %122 = vmatprep.subr.bf16.mxu0 0
    %123 = vmatpush1.bf16.msra.mxu0 %v107
    %124 = vmatprep.subr.bf16.mxu0 0
    %125 = vmatpush1.bf16.msra.mxu0 0
    %126 = vmatprep.subr.bf16.mxu0 0
    %127 = vmatpush1.bf16.msra.mxu0 0
    %128 = vmatprep.subr.bf16.mxu0 0
    %129 = vmatpush1.bf16.msra.mxu0 0
    %130 = vmatprep.subr.bf16.mxu0 0
    %131 = vmatpush1.bf16.msra.mxu0 0
    %132 = vmatprep.subr.bf16.mxu0 0
    %133 = vmatpush1.bf16.msra.mxu0 0
    %134 = vmatprep.subr.bf16.mxu0 0
    %135 = vmatpush1.bf16.msra.mxu0 0
    %136 = vmatprep.subr.bf16.mxu0 0
    %137 = vmatpush1.bf16.msra.mxu0 0
    %138 = vmatprep.subr.bf16.mxu0 0
    %139 = vmatpush1.bf16.msra.mxu0 0
    %140 = vmatprep.subr.bf16.mxu0 0
    %141 = vmatpush1.bf16.msra.mxu0 0
    %142 = vmatprep.subr.bf16.mxu0 0
    %143 = vmatpush1.bf16.msra.mxu0 0
    %144 = vmatprep.subr.bf16.mxu0 0
    %145 = vmatpush1.bf16.msra.mxu0 0
    %146 = vmatprep.subr.bf16.mxu0 0
    %147 = vmatpush1.bf16.msra.mxu0 0
    %148 = vmatprep.mubr.bf16.mxu0 0
    %149 = vmatmul.mubr.bf16.gmra.mrb[0].mxu0 %v114
    %v150 = vpop.f32.mrb[0].mxu0
    %v151 = vadd.f32 %v87, %v150
    %v152 = vpop.f32.mrb[0].mxu0
    %v153 = vpop.f32.mrb[0].mxu0
    %v154 = vpop.f32.mrb[0].mxu0
    %155 = vdwg.mxu0
    %s156 = sadd.s32 0, 0
    %v157 = vlaneseq
    %v158 = vshrl.u32 %v157, 7
    %s159 = smul.u32 %s156, 2
    %v160 = vstv %s159
    %v161 = vadd.s32 %v158, %v160
    %vm162 = vcmp.lt.s32.totalorder %v161, 2
    %vm163 = vcmask 1041408
    %v164 = vsel %vm163, %v151, -inf
    %165 = vmax.xlane.f32.xlu0 %v164
    %v166 = vpop.xlane.xlu0 %165
    %v167 = vsub.f32 %v151, %v166
    %v168 = vmul.f32 %v167, 1.442695
    %v169 = vpow.pop %v168
    %v170 = vsel %vm163, %v169, 0.0
    %171 = vadd.xlane.f32.xlu0 %v170
    %v172 = vpop.xlane.xlu0 %171
    %v173 = vlog2.pop %v172
    %v174 = vmul.f32 %v173, 0.6931472
    %v175 = vadd.f32 %v166, %v174
    %v176 = vlaneseq
    %v177 = vshrl.u32 %v176, 7
    %v178 = vsub.s32 1, %v177
    %v179 = vrot.slane %v83, %v178
    %v180 = vmul.f32 %v151, %v179
    %v181 = vsel %vm163, %v180, 0.0
    %182 = vadd.xlane.f32.xlu0 %v181
    %v183 = vpop.xlane.xlu0 %182
    %v184 = vsub.f32 %v175, %v183
    %v185 = vsel %vm162, %v184, 0.0
    %s186 = sld [smem:[#allocation5]]
    %s187 = scvt.s32.f32 %s186
    %vm188 = vcmp.eq.f32.partialorder %v151, %v166
    %v189 = vlaneseq
    %v190 = vshrl.u32 %v189, 7
    %v191 = vsub.s32 2, %v190
    %v192 = vrot.slane %v83, %v191
    %v193 = vsel %vm188, %v192, 128.0
    %v194 = vsel %vm163, %v193, inf
    %195 = vmin.xlane.f32.xlu0 %v194
    %v196 = vpop.xlane.xlu0 %195
    %v197 = vstv %s187
    %vm198 = vcmp.eq.f32.partialorder %v196, %v197
    %vm199 = vmand %vm162, %vm198
    %v200 = vsel %vm199, 1.0, 0.0
    %v201 = vld [vmem:[#allocation2] sm:$0x1]
    %v202 = vsel %vm163, %v185, 0.0
    %v203 = vrot.slane %v202, 4
    %v204 = vadd.f32 %v202, %v203
    %v205 = vrot.slane %v204, 2
    %v206 = vadd.f32 %v204, %v205
    %v207 = vrot.slane %v206, 1
    %v208 = vadd.f32 %v206, %v207
    %v209 = vadd.f32 %v201, %v208
    %vm210 = vcmask 0
    %211 = vst.msk [vmem:[#allocation2] sm:$0x1] %vm210, %v209
    %v212 = vld [vmem:[#allocation3] sm:$0x1]
    %v213 = vsel %vm163, %v200, 0.0
    %v214 = vrot.slane %v213, 4
    %v215 = vadd.f32 %v213, %v214
    %v216 = vrot.slane %v215, 2
    %v217 = vadd.f32 %v215, %v216
    %v218 = vrot.slane %v217, 1
    %v219 = vadd.f32 %v217, %v218
    %v220 = vadd.f32 %v212, %v219
    %221 = vst.msk [vmem:[#allocation3] sm:$0x1] %vm210, %v220
    // Predicated region
    $region30: #{tpu_custom_call.1} parent=1 // pred_check
      %p222 = pneg %p66
    $region31: #{tpu_custom_call.1} parent=1 // pred_check_branch
      %224 = sbr.rel (%p222) target = $region33
    $region32: #{tpu_custom_call.1} parent=1 // pred_region
      %v225 = vld [vmem:[#allocation2] sm:$0x1]
      %v227 = vlaneseq
      %v228 = vshrl.u32 %v227, 7
      %v229 = vsub.s32 0, %v228
      %v230 = vrot.slane %v225, %v229
      %231 = vset.pattern.permute.xlu0 0
      %232 = vperm.xlu0 %231, %v230
      %v233 = vpop.permute.xlu0 %232
      %235 = vst [vmem:[#allocation12] sm:$0xff] %v233
      %v236 = vld [vmem:[#allocation3] sm:$0x1]
      %v238 = vlaneseq
      %v239 = vshrl.u32 %v238, 7
      %v240 = vsub.s32 0, %v239
      %v241 = vrot.slane %v236, %v240
      %242 = vset.pattern.permute.xlu0 0
      %243 = vperm.xlu0 %242, %v241
      %v244 = vpop.permute.xlu0 %243
      %246 = vst [vmem:[#allocation13] sm:$0xff] %v244
    $region33: #{tpu_custom_call.1} parent=1 // pred_fallthru
      _
    // Predicated region
    $region34: #{tpu_custom_call.1} parent=1 // pred_check
      _
    $region35: #{tpu_custom_call.1} parent=1 // pred_check_branch
      %248 = sbr.rel (0) target = $region37
    $region36: #{tpu_custom_call.1} parent=1 // pred_region
      %s250 = ssub.s32 128, 128
      %251 = vsyncadd [#allocation8], %s250
      %s253 = sshll.u32 [#allocation12], 4
      %s254 = int_to_ptr.vmem [resolvable:$true] %s253
      %256 = dma.vmem_to_hbm [thread:$0]  %s254, 128, %s4, [#allocation8]
    $region37: #{tpu_custom_call.1} parent=1 // pred_fallthru
      _
    // Predicated region
    $region38: #{tpu_custom_call.1} parent=1 // pred_check
      _
    $region39: #{tpu_custom_call.1} parent=1 // pred_check_branch
      %258 = sbr.rel (0) target = $region41
    $region40: #{tpu_custom_call.1} parent=1 // pred_region
      %s260 = ssub.s32 128, 128
      %261 = vsyncadd [#allocation14], %s260
      %s263 = sshll.u32 [#allocation13], 4
      %s264 = int_to_ptr.vmem [resolvable:$true] %s263
      %266 = dma.vmem_to_hbm [thread:$0]  %s264, 128, %s5, [#allocation14]
    $region41: #{tpu_custom_call.1} parent=1 // pred_fallthru
      _
    // Predicated region
    $region42: #{tpu_custom_call.1} parent=1 // pred_check
      _
    $region43: #{tpu_custom_call.1} parent=1 // pred_check_branch
      %268 = sbr.rel (0) target = $region45
    $region44: #{tpu_custom_call.1} parent=1 // pred_region
      %269 = dma.done [#allocation8], 128
    $region45: #{tpu_custom_call.1} parent=1 // pred_fallthru
      _
    // Predicated region
    $region46: #{tpu_custom_call.1} parent=1 // pred_check
      _
    $region47: #{tpu_custom_call.1} parent=1 // pred_check_branch
      %271 = sbr.rel (0) target = $region49
    $region48: #{tpu_custom_call.1} parent=1 // pred_region
      %272 = dma.done [#allocation14], 128
    $region49: #{tpu_custom_call.1} parent=1 // pred_fallthru
      _
    %273 = vsyncpa [#allocation7], 1
    %274 = vsyncpa [#allocation10], 1
    %275 = vsyncpa [#allocation8], 1
    %276 = vsyncpa [#allocation14], 1

</llo_original>
